<compile_context>
chip_gen: v5e
topology: v5e:2x2
jax: 0.10.0
libtpu: 0.0.40
codegen_flags: <defaults>
</compile_context>

<pallas_src>
import math

import jax
import jax.numpy as jnp
from jax.experimental import pallas as pl
from jax.experimental.pallas import tpu as pltpu


def lstm_cell_kernel(xh_ref, c_ref, w_ref, b_ref, h_out_ref, c_out_ref):
    """One LSTM cell step, fully batched.

    xh_ref: (B, input_size + H)   concat([x, h]) -- lane axis = features
    c_ref:  (B, H)
    w_ref:  (input_size + H, 4H)  packed [x2h ; h2h] weights, stored (in, out)
    b_ref:  (1, 4H)               folded bias (bx + bh)
    h_out_ref, c_out_ref: (B, H)
    """
    H = c_ref.shape[1]

    # Single fused MXU pass for all four gates across the whole batch.
    gates = jnp.dot(xh_ref[...], w_ref[...],
                    preferred_element_type=jnp.float32) + b_ref[...]      # (B, 4H)

    # PyTorch chunk order: in_gate, forget_gate, new_memory, out_gate.
    i_gate = jax.nn.sigmoid(gates[:, 0:H])
    f_gate = jax.nn.sigmoid(gates[:, H:2 * H])
    g_new = jnp.tanh(gates[:, 2 * H:3 * H])
    o_gate = jax.nn.sigmoid(gates[:, 3 * H:4 * H])

    c_new = f_gate * c_ref[...] + i_gate * g_new
    c_out_ref[...] = c_new
    h_out_ref[...] = o_gate * jnp.tanh(c_new)


def lstm_cell_c(x, h, c, w_packed, b_packed):
    """Pallas LSTMCellC forward. Returns (h_new, c_new)."""
    B, H = h.shape
    # Layout plumbing only (no compute): present a single lane-dense activation
    # slab so the kernel issues exactly one matmul.
    xh = jnp.concatenate([x, h], axis=1)                                   # (B, in + H)

    vmem = pl.BlockSpec(memory_space=pltpu.MemorySpace.VMEM)
    h_new, c_new = pl.pallas_call(
        lstm_cell_kernel,
        out_shape=(jax.ShapeDtypeStruct((B, H), jnp.float32),
                   jax.ShapeDtypeStruct((B, H), jnp.float32)),
        in_specs=[vmem, vmem, vmem, vmem],
        out_specs=(vmem, vmem),
    )(xh, c, w_packed, b_packed)
    return h_new, c_new


def init_params(key, input_size, hidden_size):
    """PyTorch-style init: every parameter ~ U(-1/sqrt(H), 1/sqrt(H)).

    Weights are stored pre-transposed as (in, out).  Packing the two weight
    matrices / biases is a one-time parameter transform (done here, not per call).
    """
    std = 1.0 / math.sqrt(hidden_size)
    kx_w, kx_b, kh_w, kh_b = jax.random.split(key, 4)
    wx = jax.random.uniform(kx_w, (input_size, 4 * hidden_size), jnp.float32, -std, std)
    bx = jax.random.uniform(kx_b, (4 * hidden_size,), jnp.float32, -std, std)
    wh = jax.random.uniform(kh_w, (hidden_size, 4 * hidden_size), jnp.float32, -std, std)
    bh = jax.random.uniform(kh_b, (4 * hidden_size,), jnp.float32, -std, std)

    p = {"wx": wx, "bx": bx, "wh": wh, "bh": bh}
    # Packed forms used by the kernel.
    p["w_packed"] = jnp.concatenate([wx, wh], axis=0)            # (in + H, 4H)
    p["b_packed"] = (bx + bh).reshape(1, 4 * hidden_size)        # (1, 4H)
    return p


def reference(x, h, c, p):
    """Pure-JAX forward matching the PyTorch LSTMCellC module."""
    gates = x @ p["wx"] + p["bx"] + h @ p["wh"] + p["bh"]        # (B, 4H)
    H = h.shape[1]
    i_gate = jax.nn.sigmoid(gates[:, 0:H])
    f_gate = jax.nn.sigmoid(gates[:, H:2 * H])
    g_new = jnp.tanh(gates[:, 2 * H:3 * H])
    o_gate = jax.nn.sigmoid(gates[:, 3 * H:4 * H])
    c_new = f_gate * c + i_gate * g_new
    h_new = o_gate * jnp.tanh(c_new)
    return h_new, c_new


if __name__ == "__main__":
    B = 2
    INPUT_SIZE = 32
    HIDDEN_SIZE = 32

    key = jax.random.PRNGKey(0)
    kx, kh, kc, kp = jax.random.split(key, 4)
    x = jax.random.normal(kx, (B, INPUT_SIZE), jnp.float32)
    h0 = jax.random.normal(kh, (B, HIDDEN_SIZE), jnp.float32)
    c0 = jax.random.normal(kc, (B, HIDDEN_SIZE), jnp.float32)

    params = init_params(kp, INPUT_SIZE, HIDDEN_SIZE)

    h_new, c_new = lstm_cell_c(x, h0, c0, params["w_packed"], params["b_packed"])
    h_new, c_new = jax.block_until_ready((h_new, c_new))

    h_ref, c_ref = reference(x, h0, c0, params)

    assert h_new.shape == (B, HIDDEN_SIZE) and c_new.shape == (B, HIDDEN_SIZE)
    assert jnp.allclose(h_new, h_ref, atol=1e-4, rtol=1e-4)
    assert jnp.allclose(c_new, c_ref, atol=1e-4, rtol=1e-4)

    print("KERNEL_OK")
</pallas_src>

<mosaic_0001>
module attributes {stable_mosaic.version = 11 : i64} {
  func.func @lstm_cell_kernel(%arg0: memref<2x64xf32, #tpu.memory_space<vmem>>, %arg1: memref<2x32xf32, #tpu.memory_space<vmem>>, %arg2: memref<64x128xf32, #tpu.memory_space<vmem>>, %arg3: memref<1x128xf32, #tpu.memory_space<vmem>>, %arg4: memref<2x32xf32, #tpu.memory_space<vmem>>, %arg5: memref<2x32xf32, #tpu.memory_space<vmem>>) attributes {dimension_semantics = [], scalar_prefetch = 0 : i64, scratch_operands = 0 : i64, tpu.core_type = #tpu.core_type<tc>} {
    %c0 = arith.constant 0 : index
    %c0_0 = arith.constant 0 : index
    %0 = vector.load %arg0[%c0, %c0_0] : memref<2x64xf32, #tpu.memory_space<vmem>>, vector<2x64xf32>
    %c0_1 = arith.constant 0 : index
    %c0_2 = arith.constant 0 : index
    %1 = vector.load %arg2[%c0_1, %c0_2] : memref<64x128xf32, #tpu.memory_space<vmem>>, vector<64x128xf32>
    %cst = arith.constant dense<0.000000e+00> : vector<2x128xf32>
    %2 = tpu.matmul %0, %1, %cst {dimension_numbers = #tpu.dot_dimension_numbers<[1], [0], [0], [1], [0, 0, 1, 1], [], []>} : vector<2x64xf32>, vector<64x128xf32>, vector<2x128xf32> -> vector<2x128xf32>
    %c0_3 = arith.constant 0 : index
    %c0_4 = arith.constant 0 : index
    %3 = vector.load %arg3[%c0_3, %c0_4] : memref<1x128xf32, #tpu.memory_space<vmem>>, vector<1x128xf32>
    %4 = vector.broadcast %3 : vector<1x128xf32> to vector<2x128xf32>
    %5 = arith.addf %2, %4 : vector<2x128xf32>
    %6 = vector.extract_strided_slice %5 {offsets = [0, 0], sizes = [2, 32], strides = [1, 1]} : vector<2x128xf32> to vector<2x32xf32>
    %7 = arith.negf %6 : vector<2x32xf32>
    %8 = math.exp %7 : vector<2x32xf32>
    %cst_5 = arith.constant 1.000000e+00 : f32
    %9 = vector.broadcast %cst_5 : f32 to vector<2x32xf32>
    %10 = arith.addf %9, %8 : vector<2x32xf32>
    %11 = arith.divf %9, %10 : vector<2x32xf32>
    %12 = vector.extract_strided_slice %5 {offsets = [0, 32], sizes = [2, 32], strides = [1, 1]} : vector<2x128xf32> to vector<2x32xf32>
    %13 = arith.negf %12 : vector<2x32xf32>
    %14 = math.exp %13 : vector<2x32xf32>
    %cst_6 = arith.constant 1.000000e+00 : f32
    %15 = vector.broadcast %cst_6 : f32 to vector<2x32xf32>
    %16 = arith.addf %15, %14 : vector<2x32xf32>
    %17 = arith.divf %15, %16 : vector<2x32xf32>
    %18 = vector.extract_strided_slice %5 {offsets = [0, 64], sizes = [2, 32], strides = [1, 1]} : vector<2x128xf32> to vector<2x32xf32>
    %19 = math.tanh %18 : vector<2x32xf32>
    %20 = vector.extract_strided_slice %5 {offsets = [0, 96], sizes = [2, 32], strides = [1, 1]} : vector<2x128xf32> to vector<2x32xf32>
    %21 = arith.negf %20 : vector<2x32xf32>
    %22 = math.exp %21 : vector<2x32xf32>
    %cst_7 = arith.constant 1.000000e+00 : f32
    %23 = vector.broadcast %cst_7 : f32 to vector<2x32xf32>
    %24 = arith.addf %23, %22 : vector<2x32xf32>
    %25 = arith.divf %23, %24 : vector<2x32xf32>
    %c0_8 = arith.constant 0 : index
    %c0_9 = arith.constant 0 : index
    %26 = vector.load %arg1[%c0_8, %c0_9] : memref<2x32xf32, #tpu.memory_space<vmem>>, vector<2x32xf32>
    %27 = arith.mulf %17, %26 : vector<2x32xf32>
    %28 = arith.mulf %11, %19 : vector<2x32xf32>
    %29 = arith.addf %27, %28 : vector<2x32xf32>
    %c0_10 = arith.constant 0 : index
    %c0_11 = arith.constant 0 : index
    %30 = vector.load %arg5[%c0_10, %c0_11] : memref<2x32xf32, #tpu.memory_space<vmem>>, vector<2x32xf32>
    tpu.vector_store %arg5[%c0_10, %c0_11], %29 {strides = array<i32>} : memref<2x32xf32, #tpu.memory_space<vmem>>, vector<2x32xf32>,
    %31 = math.tanh %29 : vector<2x32xf32>
    %32 = arith.mulf %25, %31 : vector<2x32xf32>
    %c0_12 = arith.constant 0 : index
    %c0_13 = arith.constant 0 : index
    %33 = vector.load %arg4[%c0_12, %c0_13] : memref<2x32xf32, #tpu.memory_space<vmem>>, vector<2x32xf32>
    tpu.vector_store %arg4[%c0_12, %c0_13], %32 {strides = array<i32>} : memref<2x32xf32, #tpu.memory_space<vmem>>, vector<2x32xf32>,
    return
  }
}

</mosaic_0001>

<llo_original>
// kernel: tpu_custom_call.1
$region0: #{tpu_custom_call.1}
  #allocation0 [shape = 'u32[]', space=smem, size = 0x4, offset = 0x4, fixed_abs, tag = 'smem constant byte address 0x4 - core index']
  #allocation1 [shape = 'u32[72,128]{1,0:T(1,128)}', space=vmem, size = 0x9000, scoped, tag = 'internal scratch']
  %s0 = inlined_call_operand.hbm [shape: f32[2,64], index: 0, kind: input, shape index: {}]
  %s1 = inlined_call_operand.hbm [shape: f32[2,32], index: 1, kind: input, shape index: {}]
  %s2 = inlined_call_operand.hbm [shape: f32[64,128], index: 2, kind: input, shape index: {}]
  %s3 = inlined_call_operand.vmem [shape: f32[1,128], index: 3, kind: input, shape index: {}]
  %s4 = inlined_call_operand.hbm [shape: f32[2,32], index: 4, kind: output, shape index: {0}]
  %s5 = inlined_call_operand.hbm [shape: f32[2,32], index: 5, kind: output, shape index: {1}]
  %6 = xla_tuple %s4, %s5
  %s7 = sld [smem:[#allocation0]]
  $region46: #{tpu_custom_call.1} parent=0
    _
  %s9 = ssub.s32 1, %s7
  %s10 = scalar_select 0, %s9, %s7
  $region1: #{tpu_custom_call.1} parent=0
    #allocation2 [shape = 'u8[1024]{0}', space=vmem, size = 0x400, scoped, tag = 'input window, operand 0, single buffered']
    #allocation3 [shape = 's32[1]{0}', space=sflag, size = 0x4, scoped, tag = 'scoped memory for tpu_custom_call.1']
    #allocation4 [shape = 's32[1]{0}', space=sflag, size = 0x4, scoped, tag = 'scoped memory for tpu_custom_call.1']
    #allocation5 [shape = 'u8[1024]{0}', space=vmem, size = 0x400, scoped, tag = 'input window, operand 1, single buffered']
    #allocation6 [shape = 's32[1]{0}', space=sflag, size = 0x4, scoped, tag = 'scoped memory for tpu_custom_call.1']
    #allocation7 [shape = 'u8[32768]{0}', space=vmem, size = 0x8000, scoped, tag = 'input window, operand 2, single buffered']
    #allocation8 [shape = 'u8[1024]{0}', space=vmem, size = 0x400, scoped, tag = 'output window, operand 0, single buffered']
    #allocation9 [shape = 'u8[1024]{0}', space=vmem, size = 0x400, scoped, tag = 'output window, operand 1, single buffered']
    #allocation10 [shape = 's32[1]{0}', space=sflag, size = 0x4, scoped, tag = 'scoped memory for tpu_custom_call.1']
    %11 = vsyncpa [#allocation3], 0
    %12 = vsyncpa [#allocation6], 0
    %13 = vsyncpa [#allocation4], 0
    %14 = vsyncpa [#allocation10], 0
    // Predicated region
    $region2: #{tpu_custom_call.1} parent=1 // pred_check
      _
    $region3: #{tpu_custom_call.1} parent=1 // pred_check_branch
      %16 = sbr.rel (0) target = $region5
    $region4: #{tpu_custom_call.1} parent=1 // pred_region
      %18 = vsyncadd [#allocation3], 0
      %s20 = sshll.u32 %s0, 4
      %s21 = int_to_ptr.hbm [resolvable:$true] %s20
      %s22 = sshll.u32 [#allocation2], 4
      %s23 = int_to_ptr.vmem [resolvable:$true] %s22
      %25 = dma.hbm_to_vmem [thread:$0]  %s21, 32, %s23, [#allocation3]
    $region5: #{tpu_custom_call.1} parent=1 // pred_fallthru
      _
    // Predicated region
    $region6: #{tpu_custom_call.1} parent=1 // pred_check
      _
    $region7: #{tpu_custom_call.1} parent=1 // pred_check_branch
      %27 = sbr.rel (0) target = $region9
    $region8: #{tpu_custom_call.1} parent=1 // pred_region
      %29 = vsyncadd [#allocation6], 0
      %s31 = sshll.u32 %s1, 4
      %s32 = int_to_ptr.hbm [resolvable:$true] %s31
      %s33 = sshll.u32 [#allocation5], 4
      %s34 = int_to_ptr.vmem [resolvable:$true] %s33
      %36 = dma.hbm_to_vmem [thread:$0]  %s32, 32, %s34, [#allocation6]
    $region9: #{tpu_custom_call.1} parent=1 // pred_fallthru
      _
    // Predicated region
    $region10: #{tpu_custom_call.1} parent=1 // pred_check
      _
    $region11: #{tpu_custom_call.1} parent=1 // pred_check_branch
      %38 = sbr.rel (0) target = $region13
    $region12: #{tpu_custom_call.1} parent=1 // pred_region
      %40 = vsyncadd [#allocation6], 0
      %s41 = sshll.u32 %s2, 4
      %s42 = int_to_ptr.hbm [resolvable:$true] %s41
      %s43 = sshll.u32 [#allocation7], 4
      %s44 = int_to_ptr.vmem [resolvable:$true] %s43
      %49 = dma.hbm_to_vmem [thread:$0]  %s42, 1024, %s44, [#allocation6], 128, 128, 8
    $region13: #{tpu_custom_call.1} parent=1 // pred_fallthru
      _
    // Predicated region
    $region14: #{tpu_custom_call.1} parent=1 // pred_check
      _
    $region15: #{tpu_custom_call.1} parent=1 // pred_check_branch
      %51 = sbr.rel (0) target = $region17
    $region16: #{tpu_custom_call.1} parent=1 // pred_region
      _
    $region17: #{tpu_custom_call.1} parent=1 // pred_fallthru
      _
    // Predicated region
    $region18: #{tpu_custom_call.1} parent=1 // pred_check
      _
    $region19: #{tpu_custom_call.1} parent=1 // pred_check_branch
      %53 = sbr.rel (0) target = $region21
    $region20: #{tpu_custom_call.1} parent=1 // pred_region
      %55 = dma.done [#allocation3], 32
    $region21: #{tpu_custom_call.1} parent=1 // pred_fallthru
      _
    // Predicated region
    $region22: #{tpu_custom_call.1} parent=1 // pred_check
      _
    $region23: #{tpu_custom_call.1} parent=1 // pred_check_branch
      %57 = sbr.rel (0) target = $region25
    $region24: #{tpu_custom_call.1} parent=1 // pred_region
      %59 = dma.done [#allocation6], 32
    $region25: #{tpu_custom_call.1} parent=1 // pred_fallthru
      _
    // Predicated region
    $region26: #{tpu_custom_call.1} parent=1 // pred_check
      _
    $region27: #{tpu_custom_call.1} parent=1 // pred_check_branch
      %61 = sbr.rel (0) target = $region29
    $region28: #{tpu_custom_call.1} parent=1 // pred_region
      %63 = dma.done [#allocation6], 1024
    $region29: #{tpu_custom_call.1} parent=1 // pred_fallthru
      _
    %v64 = vld [vmem:[#allocation2] sm:$0x3]
    %v65 = vld [vmem:[#allocation7] sm:$0xff]
    %v66 = vld [vmem:[#allocation7 + $0x8] sm:$0xff]
    %v67 = vld [vmem:[#allocation7 + $0x10] sm:$0xff]
    %v68 = vld [vmem:[#allocation7 + $0x18] sm:$0xff]
    %v69 = vld [vmem:[#allocation7 + $0x20] sm:$0xff]
    %v70 = vld [vmem:[#allocation7 + $0x28] sm:$0xff]
    %v71 = vld [vmem:[#allocation7 + $0x30] sm:$0xff]
    %v72 = vld [vmem:[#allocation7 + $0x38] sm:$0xff]
    %v73 = vld [vmem:[%s3] sm:$0x1]
    %v75 = vperm.slane %v73, 0
    %vm77 = vcmask 523264
    %v79 = vsel %vm77, %v64, 0
    %81 = vmatpush.msra.mxu0 0.0
    %82 = vmatpush.msra.mxu0 0.0
    %83 = vmatpush.msra.mxu0 0.0
    %84 = vmatpush.msra.mxu0 0.0
    %85 = vmatpush.msra.mxu0 0.0
    %86 = vmatpush.msra.mxu0 0.0
    %87 = vmatpush.msra.mxu0 0.0
    %88 = vmatpush.msra.mxu0 0.0
    %89 = vmatpush.msra.mxu0 %v72
    %90 = vmatpush.msra.mxu0 %v71
    %91 = vmatpush.msra.mxu0 %v70
    %92 = vmatpush.msra.mxu0 %v69
    %93 = vmatpush.msra.mxu0 %v68
    %94 = vmatpush.msra.mxu0 %v67
    %95 = vmatpush.msra.mxu0 %v66
    %96 = vmatpush.msra.mxu0 %v65
    %97 = vmatmul.f32.gmra.mxu0 %v79
    %v98 = vpop.f32.mrf.mxu0
    %v99 = vadd.f32 %v75, %v98
    %100 = vdwg.mxu0
    %v101 = vxor.u32 %v99, 2147483648
    %v102 = vmul.f32 %v101, 1.442695
    %v103 = vpow.pop %v102
    %v104 = vadd.f32 %v103, 1.0
    %v105 = vrcp.pop %v104
    %v106 = vmul.f32 %v104, %v105
    %v107 = vsub.f32 1.0, %v106
    %v108 = vmul.f32 %v105, %v107
    %v109 = vadd.f32 %v105, %v108
    %vm110 = vweird.f32 %v104
    %vm111 = vweird.f32 %v105
    %vm112 = vmor %vm110, %vm111
    %v113 = vsel %vm112, %v105, %v109
    %v114 = vand.u32 2147483647, %v104
    %vm115 = vcmp.eq.f32.partialorder %v114, 8.507059e+37
    %v116 = vand.u32 %v104, 2147483648
    %v117 = vor.u32 1.1754944e-38, %v116
    %v118 = vsel %vm115, %v117, %v113
    %v119 = vmul.f32 1.0, %v118
    %v120 = vtanh.pop %v99
    %v121 = vld [vmem:[#allocation5] sm:$0x3]
    %123 = vrot.lane.b32.xlu0 %v121, 32
    %v124 = vpop.permute.xlu0 %123
    %v126 = vmul.f32 %v119, %v124
    %128 = vrot.lane.b32.xlu0 %v120, 64
    %v129 = vpop.permute.xlu0 %128
    %v131 = vmul.f32 %v119, %v129
    %133 = vrot.lane.b32.xlu0 %v131, 32
    %v134 = vpop.permute.xlu0 %133
    %v136 = vadd.f32 %v126, %v134
    %138 = vrot.lane.b32.xlu0 %v136, 96
    %v139 = vpop.permute.xlu0 %138
    %vm141 = vcmask 254976
    %142 = vst.msk [vmem:[#allocation9] sm:$0x3] %vm141, %v139
    %v143 = vtanh.pop %v136
    %145 = vrot.lane.b32.xlu0 %v143, 64
    %v146 = vpop.permute.xlu0 %145
    %v148 = vmul.f32 %v119, %v146
    %150 = vrot.lane.b32.xlu0 %v148, 32
    %v151 = vpop.permute.xlu0 %150
    %153 = vst.msk [vmem:[#allocation8] sm:$0x3] %vm141, %v151
    // Predicated region
    $region30: #{tpu_custom_call.1} parent=1 // pred_check
      _
    $region31: #{tpu_custom_call.1} parent=1 // pred_check_branch
      %155 = sbr.rel (0) target = $region33
    $region32: #{tpu_custom_call.1} parent=1 // pred_region
      %157 = vsyncadd [#allocation4], 0
      %s159 = sshll.u32 [#allocation8], 4
      %s160 = int_to_ptr.vmem [resolvable:$true] %s159
      %s161 = sshll.u32 %s4, 4
      %s162 = int_to_ptr.hbm [resolvable:$true] %s161
      %164 = dma.vmem_to_hbm [thread:$0]  %s160, 32, %s162, [#allocation4]
    $region33: #{tpu_custom_call.1} parent=1 // pred_fallthru
      _
    // Predicated region
    $region34: #{tpu_custom_call.1} parent=1 // pred_check
      _
    $region35: #{tpu_custom_call.1} parent=1 // pred_check_branch
      %166 = sbr.rel (0) target = $region37
    $region36: #{tpu_custom_call.1} parent=1 // pred_region
      %168 = vsyncadd [#allocation10], 0
      %s170 = sshll.u32 [#allocation9], 4
      %s171 = int_to_ptr.vmem [resolvable:$true] %s170
      %s172 = sshll.u32 %s5, 4
      %s173 = int_to_ptr.hbm [resolvable:$true] %s172
      %175 = dma.vmem_to_hbm [thread:$0]  %s171, 32, %s173, [#allocation10]
    $region37: #{tpu_custom_call.1} parent=1 // pred_fallthru
      _
    // Predicated region
    $region38: #{tpu_custom_call.1} parent=1 // pred_check
      _
    $region39: #{tpu_custom_call.1} parent=1 // pred_check_branch
      %177 = sbr.rel (0) target = $region41
    $region40: #{tpu_custom_call.1} parent=1 // pred_region
      %179 = dma.done [#allocation4], 32
    $region41: #{tpu_custom_call.1} parent=1 // pred_fallthru
      _
    // Predicated region
    $region42: #{tpu_custom_call.1} parent=1 // pred_check
      _
    $region43: #{tpu_custom_call.1} parent=1 // pred_check_branch
      %181 = sbr.rel (0) target = $region45
    $region44: #{tpu_custom_call.1} parent=1 // pred_region
      %183 = dma.done [#allocation10], 32
    $region45: #{tpu_custom_call.1} parent=1 // pred_fallthru
      _
    %184 = vsyncpa [#allocation3], 1
    %185 = vsyncpa [#allocation6], 1
    %186 = vsyncpa [#allocation4], 1
    %187 = vsyncpa [#allocation10], 1

</llo_original>
